<compile_context>
chip_gen: v7x
topology: tpu7x:2x2x1
jax: 0.10.0
libtpu: 0.0.40
codegen_flags: <defaults>
</compile_context>

<pallas_src>
import functools

import jax
import jax.numpy as jnp
from jax import lax
from jax.experimental import pallas as pl
from jax.experimental.pallas import tpu as pltpu


_LANE_WIDTHS = (2048, 1024, 512, 256, 128)   # candidate lane-dense widths
_TILE_ELEMS = 2 * 1024 * 1024                # 8 MiB of f32 per input tile
_MIN_PALLAS_ELEMS = 1024                     # below this, XLA fusion wins
_MAX_SPLITS = 2                              # "parallel" axis -> 2 TCs on v7x
_VMEM_LIMIT_BYTES = 40 * 1024 * 1024         # 2 inputs x 2 bufs x 8 MiB + acc


def _bce_partial_sum_kernel(y_ref, p_ref, o_ref, acc_ref, *,
                            rows_total, tile_rows, acc_rows,
                            blocks_per_split, full_blocks, needs_mask):
    c = pl.program_id(0)   # split ("parallel") index
    i = pl.program_id(1)   # reduction step ("arbitrary")

    @pl.when(i == 0)
    def _():
        acc_ref[...] = jnp.zeros_like(acc_ref)

    y = y_ref[...].astype(jnp.float32)
    p = p_ref[...].astype(jnp.float32)

    # PyTorch nn.BCELoss element: -(y*log(p) + (1-y)*log(1-p)), logs clamped
    # at -100.  Soft targets are allowed, so keep both log terms.
    log_p = jnp.maximum(jnp.log(p), -100.0)
    log_1mp = jnp.maximum(jnp.log(1.0 - p), -100.0)
    bce = -(y * log_p + (1.0 - y) * log_1mp)

    def _sublane_reduce(x):
        # (tile_rows, W) -> (acc_rows, W): VPU-only adds of sublane-aligned
        # (acc_rows, W) slabs; no cross-lane (XLU) traffic, no full-tile RMW.
        if tile_rows == acc_rows:
            return x
        return x.reshape(tile_rows // acc_rows, acc_rows, x.shape[-1]).sum(axis=0)

    if needs_mask:
        # Logical (unclamped) block index.  Only the genuinely partial block
        # and the over-hanging split step(s) pay for iota/compare/select.
        lb = c * blocks_per_split + i

        @pl.when(lb < full_blocks)
        def _():
            acc_ref[...] += _sublane_reduce(bce)

        @pl.when(lb >= full_blocks)
        def _():
            row_ids = lb * tile_rows + lax.broadcasted_iota(
                jnp.int32, bce.shape, 0)
            # Rows past the end of the array (partial last block / duplicated
            # over-hanging block) contribute exactly zero.  Garbage / NaN in
            # the unselected branch does not propagate through the select.
            masked = jnp.where(row_ids < rows_total, bce, 0.0)
            acc_ref[...] += _sublane_reduce(masked)
    else:
        acc_ref[...] += _sublane_reduce(bce)

    @pl.when(i == pl.num_programs(1) - 1)
    def _():
        # Single cross-lane (XLU) reduction per split, once at the end;
        # broadcast into a lane-dense (8, 128) block -> unmasked store.
        o_ref[...] = jnp.full(o_ref.shape, jnp.sum(acc_ref[...]),
                              dtype=jnp.float32)


def _bce_sum_xla(y, p):
    yf = y.astype(jnp.float32)
    pf = p.astype(jnp.float32)
    lp = jnp.maximum(jnp.log(pf), -100.0)
    l1p = jnp.maximum(jnp.log(1.0 - pf), -100.0)
    return jnp.sum(-(yf * lp + (1.0 - yf) * l1p))


def _bce_elementwise_sum(y, p):
    """Sum over all elements of the (clamped) elementwise BCE of (y, p)."""
    n = int(y.size)
    width = next((w for w in _LANE_WIDTHS if n % w == 0), None)
    if n < _MIN_PALLAS_ELEMS or width is None:
        # Tiny or lane-unfriendly sizes: pallas_call overhead dominates.
        # TODO(synk): pad lane-unfriendly sizes with neutral (y=1, p=1)
        #             elements instead of falling back to XLA.
        return _bce_sum_xla(y, p)

    rows = n // width
    tile_target = max(_TILE_ELEMS // width, 8)   # power of two, multiple of 8
    tile_rows = tile_target if rows > tile_target else rows
    n_blocks = pl.cdiv(rows, tile_rows)
    num_splits = min(_MAX_SPLITS, n_blocks)      # no split if a single block
    blocks_per_split = pl.cdiv(n_blocks, num_splits)
    full_blocks = rows // tile_rows              # blocks fully inside array
    needs_mask = (rows % tile_rows != 0) or (
        num_splits * blocks_per_split != n_blocks)
    # Small accumulator: one (8, W) slab unless the single block is not a
    # multiple of 8 rows (then the block equals the full array anyway).
    acc_rows = 8 if tile_rows % 8 == 0 else tile_rows

    # Zero-copy, lane-dense 2-D views of the original arrays (native dtype).
    y2 = y.reshape(rows, width)
    p2 = p.reshape(rows, width)

    def idx_map(c, i):
        # Clamp so an over-hanging split step never DMAs past the array; the
        # in-kernel row mask zeroes any duplicated contribution.
        return (jnp.minimum(c * blocks_per_split + i, n_blocks - 1), 0)

    kernel = functools.partial(
        _bce_partial_sum_kernel,
        rows_total=rows,
        tile_rows=tile_rows,
        acc_rows=acc_rows,
        blocks_per_split=blocks_per_split,
        full_blocks=full_blocks,
        needs_mask=needs_mask,
    )

    out = pl.pallas_call(
        kernel,
        out_shape=jax.ShapeDtypeStruct((num_splits * 8, 128), jnp.float32),
        grid_spec=pltpu.PrefetchScalarGridSpec(
            num_scalar_prefetch=0,
            grid=(num_splits, blocks_per_split),
            in_specs=[
                pl.BlockSpec((tile_rows, width), idx_map),
                pl.BlockSpec((tile_rows, width), idx_map),
            ],
            out_specs=pl.BlockSpec((8, 128), lambda c, i: (c, 0)),
            scratch_shapes=[pltpu.VMEM((acc_rows, width), jnp.float32)],
        ),
        compiler_params=pltpu.CompilerParams(
            dimension_semantics=("parallel", "arbitrary"),
            vmem_limit_bytes=_VMEM_LIMIT_BYTES),
    )(y2, p2)

    # one partial sum per split, written at rows 0, 8, ... of the output
    return jnp.sum(out[::8, 0])


def loss_forward(Yg, Yl, Yghat, Ylhat):
    """JAX/Pallas equivalent of Loss.forward.

    Yg:    [B, C]    target global labels
    Yl:    [L, B, C] target local labels (iterated over dim 0)
    Yghat: [B, C]    predicted global probabilities in (0, 1)
    Ylhat: [L, B, C] predicted local probabilities in (0, 1)
    """
    B, C = Yg.shape
    total = _bce_elementwise_sum(Yg, Yghat)
    if Yl.size:
        total = total + _bce_elementwise_sum(Yl, Ylhat)
    return total / jnp.float32(B * C)


def _reference_loss(Yg, Yl, Yghat, Ylhat):
    def bce_mean(y, p):
        y = y.astype(jnp.float32)
        p = p.astype(jnp.float32)
        lp = jnp.maximum(jnp.log(p), -100.0)
        l1p = jnp.maximum(jnp.log(1.0 - p), -100.0)
        return jnp.mean(-(y * lp + (1.0 - y) * l1p))

    total = bce_mean(Yg, Yghat)
    for i in range(Yl.shape[0]):
        total = total + bce_mean(Yl[i], Ylhat[i])
    return total


def _make_inputs(key, B, C, L):
    k1, k2, k3, k4 = jax.random.split(key, 4)
    Yg = (jax.random.uniform(k1, (B, C)) > 0.5).astype(jnp.float32)
    Yl = (jax.random.uniform(k2, (L, B, C)) > 0.5).astype(jnp.float32)
    Yghat = jax.nn.sigmoid(jax.random.normal(k3, (B, C), dtype=jnp.float32))
    Ylhat = jax.nn.sigmoid(jax.random.normal(k4, (L, B, C), dtype=jnp.float32))
    return Yg, Yl, Yghat, Ylhat


if __name__ == "__main__":
    key = jax.random.PRNGKey(0)
    k_small, k_med, k_big = jax.random.split(key, 3)

    loss_fn = jax.jit(loss_forward)
    ref_fn = jax.jit(_reference_loss)

    # Small config: single-block Pallas path, no split, no masking.
    inputs = _make_inputs(k_small, B=8, C=128, L=3)
    out = jax.block_until_ready(loss_fn(*inputs))
    ref = jax.block_until_ready(ref_fn(*inputs))
    assert jnp.allclose(out, ref, rtol=1e-5, atol=1e-6), (out, ref)

    # Medium config: lane-dense views with rows not a multiple of 8
    # (block == full array) and the sublane partial-reduce path.
    inputs = _make_inputs(k_med, B=640, C=832, L=2)
    out = jax.block_until_ready(loss_fn(*inputs))
    ref = jax.block_until_ready(ref_fn(*inputs))
    assert jnp.allclose(out, ref, rtol=2e-4, atol=1e-6), (out, ref)

    # Larger config: multi-block pipelined grid, partial last block,
    # 2-way split with an over-hanging (fully masked) step.
    inputs = _make_inputs(k_big, B=1024, C=1024, L=5)
    out = jax.block_until_ready(loss_fn(*inputs))
    ref = jax.block_until_ready(ref_fn(*inputs))
    assert jnp.allclose(out, ref, rtol=2e-4, atol=1e-6), (out, ref)

    print("KERNEL_OK")
</pallas_src>

<mosaic_0001>
module attributes {stable_mosaic.version = 11 : i64} {
  func.func @_bce_partial_sum_kernel(%arg0: i32, %arg1: i32, %arg2: memref<1x1024xf32, #tpu.memory_space<vmem>>, %arg3: memref<1x1024xf32, #tpu.memory_space<vmem>>, %arg4: memref<8x128xf32, #tpu.memory_space<vmem>>, %arg5: memref<1x1024xf32, #tpu.memory_space<vmem>>) attributes {dimension_semantics = [#tpu.dimension_semantics<parallel>, #tpu.dimension_semantics<arbitrary>], iteration_bounds = array<i64: 1, 1>, scalar_prefetch = 0 : i64, scratch_operands = 1 : i64, tpu.core_type = #tpu.core_type<tc>, window_params = [{transform_indices = @transform_0, window_bounds = array<i64: 1, 1024>}, {transform_indices = @transform_1, window_bounds = array<i64: 1, 1024>}, {transform_indices = @transform_2, window_bounds = array<i64: 8, 128>}]} {
    %c0_i32 = arith.constant 0 : i32
    %0 = arith.cmpi eq, %arg1, %c0_i32 : i32
    %1 = arith.extui %0 : i1 to i32
    %c0_i32_0 = arith.constant 0 : i32
    %2 = arith.cmpi ne, %1, %c0_i32_0 : i32
    scf.if %2 {
      %cst_14 = arith.constant 0.000000e+00 : f32
      %26 = vector.broadcast %cst_14 : f32 to vector<1x1024xf32>
      %c0_15 = arith.constant 0 : index
      %c0_16 = arith.constant 0 : index
      %27 = vector.load %arg5[%c0_15, %c0_16] : memref<1x1024xf32, #tpu.memory_space<vmem>>, vector<1x1024xf32>
      tpu.vector_store %arg5[%c0_15, %c0_16], %26 {strides = array<i32>} : memref<1x1024xf32, #tpu.memory_space<vmem>>, vector<1x1024xf32>,
    } else {
    }
    %c0 = arith.constant 0 : index
    %c0_1 = arith.constant 0 : index
    %3 = vector.load %arg2[%c0, %c0_1] : memref<1x1024xf32, #tpu.memory_space<vmem>>, vector<1x1024xf32>
    %c0_2 = arith.constant 0 : index
    %c0_3 = arith.constant 0 : index
    %4 = vector.load %arg3[%c0_2, %c0_3] : memref<1x1024xf32, #tpu.memory_space<vmem>>, vector<1x1024xf32>
    %5 = math.log %4 : vector<1x1024xf32>
    %cst = arith.constant -1.000000e+02 : f32
    %6 = vector.broadcast %cst : f32 to vector<1x1024xf32>
    %7 = arith.maximumf %5, %6 : vector<1x1024xf32>
    %cst_4 = arith.constant 1.000000e+00 : f32
    %8 = vector.broadcast %cst_4 : f32 to vector<1x1024xf32>
    %9 = arith.subf %8, %4 : vector<1x1024xf32>
    %10 = math.log %9 : vector<1x1024xf32>
    %cst_5 = arith.constant -1.000000e+02 : f32
    %11 = vector.broadcast %cst_5 : f32 to vector<1x1024xf32>
    %12 = arith.maximumf %10, %11 : vector<1x1024xf32>
    %13 = arith.mulf %3, %7 : vector<1x1024xf32>
    %cst_6 = arith.constant 1.000000e+00 : f32
    %14 = vector.broadcast %cst_6 : f32 to vector<1x1024xf32>
    %15 = arith.subf %14, %3 : vector<1x1024xf32>
    %16 = arith.mulf %15, %12 : vector<1x1024xf32>
    %17 = arith.addf %13, %16 : vector<1x1024xf32>
    %cst_7 = arith.constant 0.000000e+00 : f32
    %18 = vector.broadcast %cst_7 : f32 to vector<1x1024xf32>
    %19 = arith.subf %18, %17 : vector<1x1024xf32>
    %c0_8 = arith.constant 0 : index
    %c0_9 = arith.constant 0 : index
    %20 = vector.load %arg5[%c0_8, %c0_9] : memref<1x1024xf32, #tpu.memory_space<vmem>>, vector<1x1024xf32>
    %21 = arith.addf %20, %19 : vector<1x1024xf32>
    %c0_10 = arith.constant 0 : index
    %c0_11 = arith.constant 0 : index
    %22 = vector.load %arg5[%c0_10, %c0_11] : memref<1x1024xf32, #tpu.memory_space<vmem>>, vector<1x1024xf32>
    tpu.vector_store %arg5[%c0_10, %c0_11], %21 {strides = array<i32>} : memref<1x1024xf32, #tpu.memory_space<vmem>>, vector<1x1024xf32>,
    %c0_i32_12 = arith.constant 0 : i32
    %23 = arith.cmpi eq, %arg1, %c0_i32_12 : i32
    %24 = arith.extui %23 : i1 to i32
    %c0_i32_13 = arith.constant 0 : i32
    %25 = arith.cmpi ne, %24, %c0_i32_13 : i32
    scf.if %25 {
      %c0_14 = arith.constant 0 : index
      %c0_15 = arith.constant 0 : index
      %26 = vector.load %arg5[%c0_14, %c0_15] : memref<1x1024xf32, #tpu.memory_space<vmem>>, vector<1x1024xf32>
      %27 = vector.shape_cast %26 : vector<1x1024xf32> to vector<1x1x1024xf32>
      %cst_16 = arith.constant dense<0.000000e+00> : vector<1xf32>
      %28 = vector.multi_reduction <add>, %27, %cst_16 [1, 2] : vector<1x1x1024xf32> to vector<1xf32>
      %29 = vector.shape_cast %28 : vector<1xf32> to vector<1x1x1xf32>
      %30 = vector.extract %29[0, 0, 0] : f32 from vector<1x1x1xf32>
      %31 = vector.broadcast %30 : f32 to vector<8x128xf32>
      %c0_17 = arith.constant 0 : index
      %c0_18 = arith.constant 0 : index
      %32 = vector.load %arg4[%c0_17, %c0_18] : memref<8x128xf32, #tpu.memory_space<vmem>>, vector<8x128xf32>
      tpu.vector_store %arg4[%c0_17, %c0_18], %31 {strides = array<i32>} : memref<8x128xf32, #tpu.memory_space<vmem>>, vector<8x128xf32>,
    } else {
    }
    return
  }
  func.func @transform_0(%arg0: i32, %arg1: i32) -> (i32, i32) {
    %c1_i32 = arith.constant 1 : i32
    %0 = arith.muli %arg0, %c1_i32 : i32
    %1 = arith.addi %0, %arg1 : i32
    %c0_i32 = arith.constant 0 : i32
    %2 = arith.minsi %1, %c0_i32 : i32
    %c0_i32_0 = arith.constant 0 : i32
    %c0_i32_1 = arith.constant 0 : i32
    return %2, %c0_i32_0 : i32, i32
  }
  func.func @transform_1(%arg0: i32, %arg1: i32) -> (i32, i32) {
    %c1_i32 = arith.constant 1 : i32
    %0 = arith.muli %arg0, %c1_i32 : i32
    %1 = arith.addi %0, %arg1 : i32
    %c0_i32 = arith.constant 0 : i32
    %2 = arith.minsi %1, %c0_i32 : i32
    %c0_i32_0 = arith.constant 0 : i32
    %c0_i32_1 = arith.constant 0 : i32
    return %2, %c0_i32_0 : i32, i32
  }
  func.func @transform_2(%arg0: i32, %arg1: i32) -> (i32, i32) {
    %c0_i32 = arith.constant 0 : i32
    %c0_i32_0 = arith.constant 0 : i32
    return %arg0, %c0_i32 : i32, i32
  }
}

module attributes {stable_mosaic.version = 11 : i64} {
  func.func @_bce_partial_sum_kernel(%arg0: i32, %arg1: i32, %arg2: memref<3x1024xf32, #tpu.memory_space<vmem>>, %arg3: memref<3x1024xf32, #tpu.memory_space<vmem>>, %arg4: memref<8x128xf32, #tpu.memory_space<vmem>>, %arg5: memref<3x1024xf32, #tpu.memory_space<vmem>>) attributes {dimension_semantics = [#tpu.dimension_semantics<parallel>, #tpu.dimension_semantics<arbitrary>], iteration_bounds = array<i64: 1, 1>, scalar_prefetch = 0 : i64, scratch_operands = 1 : i64, tpu.core_type = #tpu.core_type<tc>, window_params = [{transform_indices = @transform_0, window_bounds = array<i64: 3, 1024>}, {transform_indices = @transform_1, window_bounds = array<i64: 3, 1024>}, {transform_indices = @transform_2, window_bounds = array<i64: 8, 128>}]} {
    %c0_i32 = arith.constant 0 : i32
    %0 = arith.cmpi eq, %arg1, %c0_i32 : i32
    %1 = arith.extui %0 : i1 to i32
    %c0_i32_0 = arith.constant 0 : i32
    %2 = arith.cmpi ne, %1, %c0_i32_0 : i32
    scf.if %2 {
      %cst_14 = arith.constant 0.000000e+00 : f32
      %26 = vector.broadcast %cst_14 : f32 to vector<3x1024xf32>
      %c0_15 = arith.constant 0 : index
      %c0_16 = arith.constant 0 : index
      %27 = vector.load %arg5[%c0_15, %c0_16] : memref<3x1024xf32, #tpu.memory_space<vmem>>, vector<3x1024xf32>
      tpu.vector_store %arg5[%c0_15, %c0_16], %26 {strides = array<i32>} : memref<3x1024xf32, #tpu.memory_space<vmem>>, vector<3x1024xf32>,
    } else {
    }
    %c0 = arith.constant 0 : index
    %c0_1 = arith.constant 0 : index
    %3 = vector.load %arg2[%c0, %c0_1] : memref<3x1024xf32, #tpu.memory_space<vmem>>, vector<3x1024xf32>
    %c0_2 = arith.constant 0 : index
    %c0_3 = arith.constant 0 : index
    %4 = vector.load %arg3[%c0_2, %c0_3] : memref<3x1024xf32, #tpu.memory_space<vmem>>, vector<3x1024xf32>
    %5 = math.log %4 : vector<3x1024xf32>
    %cst = arith.constant -1.000000e+02 : f32
    %6 = vector.broadcast %cst : f32 to vector<3x1024xf32>
    %7 = arith.maximumf %5, %6 : vector<3x1024xf32>
    %cst_4 = arith.constant 1.000000e+00 : f32
    %8 = vector.broadcast %cst_4 : f32 to vector<3x1024xf32>
    %9 = arith.subf %8, %4 : vector<3x1024xf32>
    %10 = math.log %9 : vector<3x1024xf32>
    %cst_5 = arith.constant -1.000000e+02 : f32
    %11 = vector.broadcast %cst_5 : f32 to vector<3x1024xf32>
    %12 = arith.maximumf %10, %11 : vector<3x1024xf32>
    %13 = arith.mulf %3, %7 : vector<3x1024xf32>
    %cst_6 = arith.constant 1.000000e+00 : f32
    %14 = vector.broadcast %cst_6 : f32 to vector<3x1024xf32>
    %15 = arith.subf %14, %3 : vector<3x1024xf32>
    %16 = arith.mulf %15, %12 : vector<3x1024xf32>
    %17 = arith.addf %13, %16 : vector<3x1024xf32>
    %cst_7 = arith.constant 0.000000e+00 : f32
    %18 = vector.broadcast %cst_7 : f32 to vector<3x1024xf32>
    %19 = arith.subf %18, %17 : vector<3x1024xf32>
    %c0_8 = arith.constant 0 : index
    %c0_9 = arith.constant 0 : index
    %20 = vector.load %arg5[%c0_8, %c0_9] : memref<3x1024xf32, #tpu.memory_space<vmem>>, vector<3x1024xf32>
    %21 = arith.addf %20, %19 : vector<3x1024xf32>
    %c0_10 = arith.constant 0 : index
    %c0_11 = arith.constant 0 : index
    %22 = vector.load %arg5[%c0_10, %c0_11] : memref<3x1024xf32, #tpu.memory_space<vmem>>, vector<3x1024xf32>
    tpu.vector_store %arg5[%c0_10, %c0_11], %21 {strides = array<i32>} : memref<3x1024xf32, #tpu.memory_space<vmem>>, vector<3x1024xf32>,
    %c0_i32_12 = arith.constant 0 : i32
    %23 = arith.cmpi eq, %arg1, %c0_i32_12 : i32
    %24 = arith.extui %23 : i1 to i32
    %c0_i32_13 = arith.constant 0 : i32
    %25 = arith.cmpi ne, %24, %c0_i32_13 : i32
    scf.if %25 {
      %c0_14 = arith.constant 0 : index
      %c0_15 = arith.constant 0 : index
      %26 = vector.load %arg5[%c0_14, %c0_15] : memref<3x1024xf32, #tpu.memory_space<vmem>>, vector<3x1024xf32>
      %27 = vector.shape_cast %26 : vector<3x1024xf32> to vector<1x3x1024xf32>
      %cst_16 = arith.constant dense<0.000000e+00> : vector<1xf32>
      %28 = vector.multi_reduction <add>, %27, %cst_16 [1, 2] : vector<1x3x1024xf32> to vector<1xf32>
      %29 = vector.shape_cast %28 : vector<1xf32> to vector<1x1x1xf32>
      %30 = vector.extract %29[0, 0, 0] : f32 from vector<1x1x1xf32>
      %31 = vector.broadcast %30 : f32 to vector<8x128xf32>
      %c0_17 = arith.constant 0 : index
      %c0_18 = arith.constant 0 : index
      %32 = vector.load %arg4[%c0_17, %c0_18] : memref<8x128xf32, #tpu.memory_space<vmem>>, vector<8x128xf32>
      tpu.vector_store %arg4[%c0_17, %c0_18], %31 {strides = array<i32>} : memref<8x128xf32, #tpu.memory_space<vmem>>, vector<8x128xf32>,
    } else {
    }
    return
  }
  func.func @transform_0(%arg0: i32, %arg1: i32) -> (i32, i32) {
    %c1_i32 = arith.constant 1 : i32
    %0 = arith.muli %arg0, %c1_i32 : i32
    %1 = arith.addi %0, %arg1 : i32
    %c0_i32 = arith.constant 0 : i32
    %2 = arith.minsi %1, %c0_i32 : i32
    %c0_i32_0 = arith.constant 0 : i32
    %c0_i32_1 = arith.constant 0 : i32
    return %2, %c0_i32_0 : i32, i32
  }
  func.func @transform_1(%arg0: i32, %arg1: i32) -> (i32, i32) {
    %c1_i32 = arith.constant 1 : i32
    %0 = arith.muli %arg0, %c1_i32 : i32
    %1 = arith.addi %0, %arg1 : i32
    %c0_i32 = arith.constant 0 : i32
    %2 = arith.minsi %1, %c0_i32 : i32
    %c0_i32_0 = arith.constant 0 : i32
    %c0_i32_1 = arith.constant 0 : i32
    return %2, %c0_i32_0 : i32, i32
  }
  func.func @transform_2(%arg0: i32, %arg1: i32) -> (i32, i32) {
    %c0_i32 = arith.constant 0 : i32
    %c0_i32_0 = arith.constant 0 : i32
    return %arg0, %c0_i32 : i32, i32
  }
}

</mosaic_0001>

<llo_original>
// kernel: loss_forward.3
$region0: #{loss_forward.3}
  #allocation0 [shape = 'u32[]', space=smem, size = 0x4, offset = 0x4, fixed_abs, tag = 'smem constant byte address 0x4 - core index']
  #allocation1 [shape = 'u32[144,128]{1,0:T(1,128)}', space=vmem, size = 0x12000, scoped, tag = 'internal scratch']
  #allocation2 [shape = 'f32[3,1024]{1,0:T(4,128)}', space=vmem, size = 0x4000, scoped, tag = 'scratch operand']
  %s0 = inlined_call_operand.vmem [shape: f32[3,1024], index: 0, kind: input, shape index: {}]
  %s1 = inlined_call_operand.vmem [shape: f32[3,1024], index: 1, kind: input, shape index: {}]
  %s2 = inlined_call_operand.vmem [shape: f32[8,128], index: 2, kind: output, shape index: {}]
  %s3 = sld [smem:[#allocation0]]
  $region26: #{loss_forward.3} parent=0
    _
  %s5 = ssub.s32 1, %s3
  %s6 = scalar_select 0, %s5, %s3
  // Predicated region
  $region2: #{loss_forward.3} parent=0 // pred_check
    _
  $region3: #{loss_forward.3} parent=0 // pred_check_branch
    %8 = sbr.rel (0) target = $region5
  $region4: #{loss_forward.3} parent=0 // pred_region
    %s9 = sadd.s32 0, 0
    %p10 = scmp.lt.s32.totalorder %s9, 0
    %s11 = scalar_select %p10, %s9, 0
    %p12 = scmp.lt.s32.totalorder %s11, 0
    %s13 = scalar_select %p12, %s11, 0
    %s14 = smul.addr %s13, 8
    %s15 = smul.addr %s14, 4
    %s16 = scalar_lea.vmem %s0, %s15
    %s17 = sadd.s32 0, 0
    %p18 = scmp.lt.s32.totalorder %s17, 0
    %s19 = scalar_select %p18, %s17, 0
  $region5: #{loss_forward.3} parent=0 // pred_fallthru
    _
  // Predicated region
  $region6: #{loss_forward.3} parent=0 // pred_check
    _
  $region7: #{loss_forward.3} parent=0 // pred_check_branch
    %21 = sbr.rel (0) target = $region9
  $region8: #{loss_forward.3} parent=0 // pred_region
    %s22 = sadd.s32 0, 0
    %p23 = scmp.lt.s32.totalorder %s22, 0
    %s24 = scalar_select %p23, %s22, 0
    %p25 = scmp.lt.s32.totalorder %s24, 0
    %s26 = scalar_select %p25, %s24, 0
    %s27 = smul.addr %s26, 8
    %s28 = smul.addr %s27, 4
    %s29 = scalar_lea.vmem %s1, %s28
    %s30 = sadd.s32 0, 0
    %p31 = scmp.lt.s32.totalorder %s30, 0
    %s32 = scalar_select %p31, %s30, 0
  $region9: #{loss_forward.3} parent=0 // pred_fallthru
    _
  %s33 = sadd.s32 0, 0
  %p34 = scmp.lt.s32.totalorder %s33, 0
  %s35 = scalar_select %p34, %s33, 0
  %p36 = scmp.lt.s32.totalorder %s35, 0
  %s37 = scalar_select %p36, %s35, 0
  %s38 = smul.addr %s37, 8
  %s39 = smul.addr %s38, 4
  %s40 = scalar_lea.vmem %s0, %s39
  %s41 = sadd.s32 0, 0
  %p42 = scmp.lt.s32.totalorder %s41, 0
  %s43 = scalar_select %p42, %s41, 0
  %p44 = scmp.lt.s32.totalorder %s43, 0
  %s45 = scalar_select %p44, %s43, 0
  %s46 = smul.addr %s45, 8
  %s47 = smul.addr %s46, 4
  %s48 = scalar_lea.vmem %s1, %s47
  %s49 = sadd.s32 0, 0
  %p50 = scmp.lt.s32.totalorder %s49, 0
  %s51 = scalar_select %p50, %s49, 0
  %p52 = scmp.lt.s32.totalorder %s51, 0
  %s53 = scalar_select %p52, %s51, 0
  %s54 = smul.addr %s53, 8
  %s55 = smul.addr %s54, 4
  %s56 = scalar_lea.vmem %s0, %s55
  %s57 = sadd.s32 0, 0
  %p58 = scmp.lt.s32.totalorder %s57, 0
  %s59 = scalar_select %p58, %s57, 0
  %s60 = sadd.s32 0, 0
  %p61 = scmp.lt.s32.totalorder %s60, 0
  %s62 = scalar_select %p61, %s60, 0
  %p63 = scmp.lt.s32.totalorder %s62, 0
  %s64 = scalar_select %p63, %s62, 0
  %s65 = smul.addr %s64, 8
  %s66 = smul.addr %s65, 4
  %s67 = scalar_lea.vmem %s1, %s66
  %s68 = sadd.s32 0, 0
  %p69 = scmp.lt.s32.totalorder %s68, 0
  %s70 = scalar_select %p69, %s68, 0
  %p71 = scmp.eq.s32.totalorder 0, 0
  // Predicated region
  $region10: #{loss_forward.3} parent=0 // pred_check
    %p72 = pneg %p71
  $region11: #{loss_forward.3} parent=0 // pred_check_branch
    %74 = sbr.rel (%p72) target = $region13
  $region12: #{loss_forward.3} parent=0 // pred_region
    %75 = vst [vmem:[#allocation2] sm:$0x77] 0.0
    %76 = vst [vmem:[#allocation2 + $0x8] sm:$0x77] 0.0
    %77 = vst [vmem:[#allocation2 + $0x10] sm:$0x77] 0.0
    %78 = vst [vmem:[#allocation2 + $0x18] sm:$0x77] 0.0
  $region13: #{loss_forward.3} parent=0 // pred_fallthru
    _
  %v79 = vld [vmem:[%s56] sm:$0x77]
  %v80 = vld [vmem:[%s56 + $0x8] sm:$0x77]
  %v81 = vld [vmem:[%s56 + $0x10] sm:$0x77]
  %v82 = vld [vmem:[%s56 + $0x18] sm:$0x77]
  %v83 = vld [vmem:[%s67] sm:$0x77]
  %v84 = vld [vmem:[%s67 + $0x8] sm:$0x77]
  %v85 = vld [vmem:[%s67 + $0x10] sm:$0x77]
  %v86 = vld [vmem:[%s67 + $0x18] sm:$0x77]
  %v87 = vlog2.pop %v83
  %v88 = vmul.f32 %v87, 0.6931472
  %v89 = vlog2.pop %v84
  %v90 = vmul.f32 %v89, 0.6931472
  %v91 = vlog2.pop %v85
  %v92 = vmul.f32 %v91, 0.6931472
  %v93 = vlog2.pop %v86
  %v94 = vmul.f32 %v93, 0.6931472
  %v95 = vmax.f32 %v88, -100.0
  %v96 = vmax.f32 %v90, -100.0
  %v97 = vmax.f32 %v92, -100.0
  %v98 = vmax.f32 %v94, -100.0
  %v99 = vsub.f32 1.0, %v83
  %v100 = vsub.f32 1.0, %v84
  %v101 = vsub.f32 1.0, %v85
  %v102 = vsub.f32 1.0, %v86
  %v103 = vlog2.pop %v99
  %v104 = vmul.f32 %v103, 0.6931472
  %v105 = vlog2.pop %v100
  %v106 = vmul.f32 %v105, 0.6931472
  %v107 = vlog2.pop %v101
  %v108 = vmul.f32 %v107, 0.6931472
  %v109 = vlog2.pop %v102
  %v110 = vmul.f32 %v109, 0.6931472
  %v111 = vmax.f32 %v104, -100.0
  %v112 = vmax.f32 %v106, -100.0
  %v113 = vmax.f32 %v108, -100.0
  %v114 = vmax.f32 %v110, -100.0
  %v115 = vmul.f32 %v79, %v95
  %v116 = vmul.f32 %v80, %v96
  %v117 = vmul.f32 %v81, %v97
  %v118 = vmul.f32 %v82, %v98
  %v119 = vsub.f32 1.0, %v79
  %v120 = vsub.f32 1.0, %v80
  %v121 = vsub.f32 1.0, %v81
  %v122 = vsub.f32 1.0, %v82
  %v123 = vmul.f32 %v119, %v111
  %v124 = vmul.f32 %v120, %v112
  %v125 = vmul.f32 %v121, %v113
  %v126 = vmul.f32 %v122, %v114
  %v127 = vadd.f32 %v115, %v123
  %v128 = vadd.f32 %v116, %v124
  %v129 = vadd.f32 %v117, %v125
  %v130 = vadd.f32 %v118, %v126
  %v131 = vsub.f32 0.0, %v127
  %v132 = vsub.f32 0.0, %v128
  %v133 = vsub.f32 0.0, %v129
  %v134 = vsub.f32 0.0, %v130
  %v135 = vld [vmem:[#allocation2] sm:$0x77]
  %v136 = vld [vmem:[#allocation2 + $0x8] sm:$0x77]
  %v137 = vld [vmem:[#allocation2 + $0x10] sm:$0x77]
  %v138 = vld [vmem:[#allocation2 + $0x18] sm:$0x77]
  %v139 = vadd.f32 %v135, %v131
  %v140 = vadd.f32 %v136, %v132
  %v141 = vadd.f32 %v137, %v133
  %v142 = vadd.f32 %v138, %v134
  %143 = vst [vmem:[#allocation2] sm:$0x77] %v139
  %144 = vst [vmem:[#allocation2 + $0x8] sm:$0x77] %v140
  %145 = vst [vmem:[#allocation2 + $0x10] sm:$0x77] %v141
  %146 = vst [vmem:[#allocation2 + $0x18] sm:$0x77] %v142
  // Predicated region
  $region14: #{loss_forward.3} parent=0 // pred_check
    %p147 = pneg %p71
  $region15: #{loss_forward.3} parent=0 // pred_check_branch
    %149 = sbr.rel (%p147) target = $region17
  $region16: #{loss_forward.3} parent=0 // pred_region
    %v150 = vld [vmem:[#allocation2] sm:$0x77]
    %v151 = vld [vmem:[#allocation2 + $0x8] sm:$0x77]
    %v152 = vld [vmem:[#allocation2 + $0x10] sm:$0x77]
    %v153 = vld [vmem:[#allocation2 + $0x18] sm:$0x77]
    %v158 = vcombine.high %v150, %v150
    %v159 = vcombine.high %v151, %v151
    %v160 = vcombine.high %v152, %v152
    %v161 = vcombine.high %v153, %v153
    %vm166 = vcmask 1042432
    %v167 = vsel %vm166, %v150, 0.0
    %v168 = vsel %vm166, %v158, 0.0
    %v169 = vadd.f32 %v167, %v168
    %v170 = vsel %vm166, %v151, 0.0
    %v171 = vadd.f32 %v169, %v170
    %v172 = vsel %vm166, %v159, 0.0
    %v173 = vadd.f32 %v171, %v172
    %v174 = vsel %vm166, %v152, 0.0
    %v175 = vadd.f32 %v173, %v174
    %v176 = vsel %vm166, %v160, 0.0
    %v177 = vadd.f32 %v175, %v176
    %v178 = vsel %vm166, %v153, 0.0
    %v179 = vadd.f32 %v177, %v178
    %v180 = vsel %vm166, %v161, 0.0
    %v181 = vadd.f32 %v179, %v180
    %182 = vadd.xlane.f32.xlu0 %v181
    %v183 = vpop.xlane.xlu0 %182
    %v184 = vrot.slane %v183, 4
    %v185 = vadd.f32 %v183, %v184
    %v186 = vrot.slane %v185, 2
    %v187 = vadd.f32 %v185, %v186
    %v188 = vrot.slane %v187, 1
    %v189 = vadd.f32 %v187, %v188
    %s190 = vtos %v189
    %v191 = vstv %s190
    %192 = vst [vmem:[%s2] sm:$0xff] %v191
  $region17: #{loss_forward.3} parent=0 // pred_fallthru
    _
  // Predicated region
  $region18: #{loss_forward.3} parent=0 // pred_check
    _
  $region19: #{loss_forward.3} parent=0 // pred_check_branch
    %194 = sbr.rel (0) target = $region21
  $region20: #{loss_forward.3} parent=0 // pred_region
    _
  $region21: #{loss_forward.3} parent=0 // pred_fallthru
    _
  // Predicated region
  $region22: #{loss_forward.3} parent=0 // pred_check
    _
  $region23: #{loss_forward.3} parent=0 // pred_check_branch
    %196 = sbr.rel (0) target = $region25
  $region24: #{loss_forward.3} parent=0 // pred_region
    _
  $region25: #{loss_forward.3} parent=0 // pred_fallthru
    _

// kernel: loss_forward.2
$region0: #{loss_forward.2}
  #allocation0 [shape = 'u32[]', space=smem, size = 0x4, offset = 0x4, fixed_abs, tag = 'smem constant byte address 0x4 - core index']
  #allocation1 [shape = 'u32[144,128]{1,0:T(1,128)}', space=vmem, size = 0x12000, scoped, tag = 'internal scratch']
  #allocation2 [shape = 'f32[1,1024]{1,0:T(1,128)}', space=vmem, size = 0x1000, scoped, tag = 'scratch operand']
  %s0 = inlined_call_operand.vmem [shape: f32[1,1024], index: 0, kind: input, shape index: {}]
  %s1 = inlined_call_operand.vmem [shape: f32[1,1024], index: 1, kind: input, shape index: {}]
  %s2 = inlined_call_operand.vmem [shape: f32[8,128], index: 2, kind: output, shape index: {}]
  %s3 = sld [smem:[#allocation0]]
  $region26: #{loss_forward.2} parent=0
    _
  %s5 = ssub.s32 1, %s3
  %s6 = scalar_select 0, %s5, %s3
  // Predicated region
  $region2: #{loss_forward.2} parent=0 // pred_check
    _
  $region3: #{loss_forward.2} parent=0 // pred_check_branch
    %8 = sbr.rel (0) target = $region5
  $region4: #{loss_forward.2} parent=0 // pred_region
    %s9 = sadd.s32 0, 0
    %p10 = scmp.lt.s32.totalorder %s9, 0
    %s11 = scalar_select %p10, %s9, 0
    %p12 = scmp.lt.s32.totalorder %s11, 0
    %s13 = scalar_select %p12, %s11, 0
    %s14 = smul.addr %s13, 8
    %s15 = scalar_lea.vmem %s0, %s14
    %s16 = sadd.s32 0, 0
    %p17 = scmp.lt.s32.totalorder %s16, 0
    %s18 = scalar_select %p17, %s16, 0
  $region5: #{loss_forward.2} parent=0 // pred_fallthru
    _
  // Predicated region
  $region6: #{loss_forward.2} parent=0 // pred_check
    _
  $region7: #{loss_forward.2} parent=0 // pred_check_branch
    %20 = sbr.rel (0) target = $region9
  $region8: #{loss_forward.2} parent=0 // pred_region
    %s21 = sadd.s32 0, 0
    %p22 = scmp.lt.s32.totalorder %s21, 0
    %s23 = scalar_select %p22, %s21, 0
    %p24 = scmp.lt.s32.totalorder %s23, 0
    %s25 = scalar_select %p24, %s23, 0
    %s26 = smul.addr %s25, 8
    %s27 = scalar_lea.vmem %s1, %s26
    %s28 = sadd.s32 0, 0
    %p29 = scmp.lt.s32.totalorder %s28, 0
    %s30 = scalar_select %p29, %s28, 0
  $region9: #{loss_forward.2} parent=0 // pred_fallthru
    _
  %s31 = sadd.s32 0, 0
  %p32 = scmp.lt.s32.totalorder %s31, 0
  %s33 = scalar_select %p32, %s31, 0
  %p34 = scmp.lt.s32.totalorder %s33, 0
  %s35 = scalar_select %p34, %s33, 0
  %s36 = smul.addr %s35, 8
  %s37 = scalar_lea.vmem %s0, %s36
  %s38 = sadd.s32 0, 0
  %p39 = scmp.lt.s32.totalorder %s38, 0
  %s40 = scalar_select %p39, %s38, 0
  %p41 = scmp.lt.s32.totalorder %s40, 0
  %s42 = scalar_select %p41, %s40, 0
  %s43 = smul.addr %s42, 8
  %s44 = scalar_lea.vmem %s1, %s43
  %s45 = sadd.s32 0, 0
  %p46 = scmp.lt.s32.totalorder %s45, 0
  %s47 = scalar_select %p46, %s45, 0
  %p48 = scmp.lt.s32.totalorder %s47, 0
  %s49 = scalar_select %p48, %s47, 0
  %s50 = smul.addr %s49, 8
  %s51 = scalar_lea.vmem %s0, %s50
  %s52 = sadd.s32 0, 0
  %p53 = scmp.lt.s32.totalorder %s52, 0
  %s54 = scalar_select %p53, %s52, 0
  %s55 = sadd.s32 0, 0
  %p56 = scmp.lt.s32.totalorder %s55, 0
  %s57 = scalar_select %p56, %s55, 0
  %p58 = scmp.lt.s32.totalorder %s57, 0
  %s59 = scalar_select %p58, %s57, 0
  %s60 = smul.addr %s59, 8
  %s61 = scalar_lea.vmem %s1, %s60
  %s62 = sadd.s32 0, 0
  %p63 = scmp.lt.s32.totalorder %s62, 0
  %s64 = scalar_select %p63, %s62, 0
  %p65 = scmp.eq.s32.totalorder 0, 0
  // Predicated region
  $region10: #{loss_forward.2} parent=0 // pred_check
    %p66 = pneg %p65
  $region11: #{loss_forward.2} parent=0 // pred_check_branch
    %68 = sbr.rel (%p66) target = $region13
  $region12: #{loss_forward.2} parent=0 // pred_region
    %69 = vst [vmem:[#allocation2] sm:$0xff] 0.0
  $region13: #{loss_forward.2} parent=0 // pred_fallthru
    _
  %v70 = vld [vmem:[%s51] sm:$0xff]
  %v71 = vld [vmem:[%s61] sm:$0xff]
  %v72 = vlog2.pop %v71
  %v73 = vmul.f32 %v72, 0.6931472
  %v74 = vmax.f32 %v73, -100.0
  %v75 = vsub.f32 1.0, %v71
  %v76 = vlog2.pop %v75
  %v77 = vmul.f32 %v76, 0.6931472
  %v78 = vmax.f32 %v77, -100.0
  %v79 = vmul.f32 %v70, %v74
  %v80 = vsub.f32 1.0, %v70
  %v81 = vmul.f32 %v80, %v78
  %v82 = vadd.f32 %v79, %v81
  %v83 = vsub.f32 0.0, %v82
  %v84 = vld [vmem:[#allocation2] sm:$0xff]
  %v85 = vadd.f32 %v84, %v83
  %86 = vst [vmem:[#allocation2] sm:$0xff] %v85
  // Predicated region
  $region14: #{loss_forward.2} parent=0 // pred_check
    %p87 = pneg %p65
  $region15: #{loss_forward.2} parent=0 // pred_check_branch
    %89 = sbr.rel (%p87) target = $region17
  $region16: #{loss_forward.2} parent=0 // pred_region
    %v90 = vld [vmem:[#allocation2] sm:$0xff]
    %v92 = vlaneseq
    %v93 = vshrl.u32 %v92, 7
    %v94 = vsub.s32 0, %v93
    %v95 = vrot.slane %v90, %v94
    %v96 = vlaneseq
    %v97 = vshrl.u32 %v96, 7
    %v98 = vsub.s32 1, %v97
    %v99 = vrot.slane %v90, %v98
    %v100 = vlaneseq
    %v101 = vshrl.u32 %v100, 7
    %v102 = vsub.s32 2, %v101
    %v103 = vrot.slane %v90, %v102
    %v104 = vlaneseq
    %v105 = vshrl.u32 %v104, 7
    %v106 = vsub.s32 3, %v105
    %v107 = vrot.slane %v90, %v106
    %v108 = vlaneseq
    %v109 = vshrl.u32 %v108, 7
    %v110 = vsub.s32 4, %v109
    %v111 = vrot.slane %v90, %v110
    %v112 = vlaneseq
    %v113 = vshrl.u32 %v112, 7
    %v114 = vsub.s32 5, %v113
    %v115 = vrot.slane %v90, %v114
    %v116 = vlaneseq
    %v117 = vshrl.u32 %v116, 7
    %v118 = vsub.s32 6, %v117
    %v119 = vrot.slane %v90, %v118
    %v120 = vlaneseq
    %v121 = vshrl.u32 %v120, 7
    %v122 = vsub.s32 7, %v121
    %v123 = vrot.slane %v90, %v122
    %vm132 = vcmask 1040384
    %v133 = vsel %vm132, %v95, 0.0
    %v134 = vsel %vm132, %v99, 0.0
    %v135 = vadd.f32 %v133, %v134
    %v136 = vsel %vm132, %v103, 0.0
    %v137 = vadd.f32 %v135, %v136
    %v138 = vsel %vm132, %v107, 0.0
    %v139 = vadd.f32 %v137, %v138
    %v140 = vsel %vm132, %v111, 0.0
    %v141 = vadd.f32 %v139, %v140
    %v142 = vsel %vm132, %v115, 0.0
    %v143 = vadd.f32 %v141, %v142
    %v144 = vsel %vm132, %v119, 0.0
    %v145 = vadd.f32 %v143, %v144
    %v146 = vsel %vm132, %v123, 0.0
    %v147 = vadd.f32 %v145, %v146
    %148 = vadd.xlane.f32.xlu0 %v147
    %v149 = vpop.xlane.xlu0 %148
    %v150 = vrot.slane %v149, 4
    %v151 = vadd.f32 %v149, %v150
    %v152 = vrot.slane %v151, 2
    %v153 = vadd.f32 %v151, %v152
    %v154 = vrot.slane %v153, 1
    %v155 = vadd.f32 %v153, %v154
    %s156 = vtos %v155
    %v157 = vstv %s156
    %158 = vst [vmem:[%s2] sm:$0xff] %v157
  $region17: #{loss_forward.2} parent=0 // pred_fallthru
    _
  // Predicated region
  $region18: #{loss_forward.2} parent=0 // pred_check
    _
  $region19: #{loss_forward.2} parent=0 // pred_check_branch
    %160 = sbr.rel (0) target = $region21
  $region20: #{loss_forward.2} parent=0 // pred_region
    _
  $region21: #{loss_forward.2} parent=0 // pred_fallthru
    _
  // Predicated region
  $region22: #{loss_forward.2} parent=0 // pred_check
    _
  $region23: #{loss_forward.2} parent=0 // pred_check_branch
    %162 = sbr.rel (0) target = $region25
  $region24: #{loss_forward.2} parent=0 // pred_region
    _
  $region25: #{loss_forward.2} parent=0 // pred_fallthru
    _

</llo_original>
